<compile_context>
chip_gen: v7x
topology: tpu7x:2x2x1
jax: 0.10.0
libtpu: 0.0.40
codegen_flags: <defaults>
</compile_context>

<pallas_src>
import numpy as np
import jax
import jax.numpy as jnp
from jax.experimental import pallas as pl
from jax.experimental.pallas import tpu as pltpu


# ---------------------------------------------------------------------------
# Small helpers
# ---------------------------------------------------------------------------
def _round_up(x, m):
    return ((x + m - 1) // m) * m


def _pad2(x, rows, cols):
    """Zero-pad a 2-D array up to (rows, cols)."""
    r, c = x.shape
    return jnp.pad(x, ((0, rows - r), (0, cols - c)))


def _pool_patches_nhwc(x_u8, P):
    """(B, H, W, 3) uint8 -> (B, P*P*3) f32 mean over the patch grid.

    Row order of the output features is (py, px, c); no transposes needed.
    """
    B, H, W, C = x_u8.shape
    x = x_u8.reshape(B, H // P, P, W // P, P, C).astype(jnp.float32)
    pooled = jnp.mean(x, axis=(1, 3))                       # (B, P, P, C)
    return pooled.reshape(B, P * P * C)


def _pool_patches_nchw(x, P):
    """(B, C, H, W) f32 -> (B, C*P*P) mean over the patch grid ((c, py, px) order)."""
    B, C, H, W = x.shape
    x = x.reshape(B, C, H // P, P, W // P, P)
    pooled = jnp.mean(x, axis=(2, 4))                       # (B, C, P, P)
    return pooled.reshape(B, C * P * P)


# ---------------------------------------------------------------------------
# Pallas kernel: batched (B_tile, K_pad) @ (K_pad, D_pad) + bias
# ---------------------------------------------------------------------------
def _pooled_linear_kernel(p_ref, w_ref, b_ref, o_ref):
    # Single MXU matmul per grid step; lane-dense (B_tile, D_pad) store.
    o_ref[...] = (
        jnp.dot(p_ref[...], w_ref[...], preferred_element_type=jnp.float32)
        + b_ref[...]
    ).astype(o_ref.dtype)


def pooled_linear_pallas(pooled, w_eff, b_eff, *, b_tile_max=256):
    """pooled: (B, K_pad) f32; w_eff: (K_pad, D_pad); b_eff: (1, D_pad) -> (B_pad, D_pad)."""
    B, K = pooled.shape
    Kp, Dp = w_eff.shape
    assert K == Kp and b_eff.shape == (1, Dp)

    # Batch tile: multiple of 8 sublanes, capped so VMEM stays small even on v7x
    # (worst case: 2 * 256*128*4 B in + 128*128*4 B weight + 256*128*4 B out << 64 MiB).
    bt = min(b_tile_max, _round_up(B, 8))
    B_pad = _round_up(B, bt)
    if B_pad != B:
        pooled = jnp.pad(pooled, ((0, B_pad - B), (0, 0)))

    return pl.pallas_call(
        _pooled_linear_kernel,
        out_shape=jax.ShapeDtypeStruct((B_pad, Dp), jnp.float32),
        grid_spec=pltpu.PrefetchScalarGridSpec(
            num_scalar_prefetch=0,
            grid=(B_pad // bt,),
            in_specs=[
                pl.BlockSpec((bt, Kp), lambda i: (i, 0)),
                pl.BlockSpec((Kp, Dp), lambda i: (0, 0)),
                pl.BlockSpec((1, Dp), lambda i: (0, 0)),
            ],
            out_specs=pl.BlockSpec((bt, Dp), lambda i: (i, 0)),
        ),
        compiler_params=pltpu.CompilerParams(
            dimension_semantics=("parallel",)),
    )(pooled, w_eff, b_eff)


# ---------------------------------------------------------------------------
# Concrete VisualEncoder (glue in plain JAX, hot path in the Pallas kernel)
# ---------------------------------------------------------------------------
class VisualEncoderPallas:
    def __init__(self, img_size=16, patch_size=4, embed_dim=32, key=None):
        self.img_size = img_size
        self.patch_size = patch_size
        self._embed_dim = embed_dim
        C, P, D = 3, patch_size, embed_dim
        K = C * P * P
        self._K, self._D = K, D
        self._K_pad = _round_up(K, 128)
        self._D_pad = _round_up(D, 128)

        if key is None:
            key = jax.random.PRNGKey(0)
        k1, k2, k3, k4 = jax.random.split(key, 4)
        # Deterministic synthetic parameters (no checkpoint loading).
        # w_patch rows are indexed (c, py, px) to match PyTorch NCHW unfold.
        self.w_patch = (jax.random.normal(k1, (K, D), jnp.float32)
                        / np.sqrt(K)).astype(jnp.float32)
        self.b_patch = 0.01 * jax.random.normal(k2, (1, D), jnp.float32)
        self.w_proj = (jax.random.normal(k3, (D, D), jnp.float32)
                       / np.sqrt(D)).astype(jnp.float32)
        self.b_proj = 0.01 * jax.random.normal(k4, (1, D), jnp.float32)
        # CLIP-style normalization constants
        self.mean = jnp.array([0.48145466, 0.4578275, 0.40821073], jnp.float32)
        self.std = jnp.array([0.26862954, 0.26130258, 0.27577711], jnp.float32)

        # --- folded effective parameters (embed @ proj collapsed) ----------
        # forward() path: input is already-preprocessed NCHW f32,
        # pooled patch rows in (c, py, px) order.
        w_eff = self.w_patch @ self.w_proj                       # (K, D)
        b_eff = self.b_patch @ self.w_proj + self.b_proj         # (1, D)
        self.w_eff_nchw = _pad2(w_eff, self._K_pad, self._D_pad)
        self.b_eff_nchw = _pad2(b_eff, 1, self._D_pad)

        # get_features() fused path: raw uint8 NHWC pixels, pooled rows in
        # (py, px, c) order, with (x/255 - mean)/std folded into the weights.
        scale = 1.0 / (255.0 * self.std)                         # (3,)
        shift = -self.mean / self.std                            # (3,)
        w1_hwc = jnp.transpose(self.w_patch.reshape(C, P, P, D),
                               (1, 2, 0, 3))                     # (P, P, C, D)
        w1_fused = (w1_hwc * scale[None, None, :, None]).reshape(K, D)
        b1_fused = self.b_patch + jnp.einsum('pqcd,c->d', w1_hwc, shift)[None, :]
        w_fused = w1_fused @ self.w_proj                         # (K, D)
        b_fused = b1_fused @ self.w_proj + self.b_proj           # (1, D)
        self.w_eff_fused = _pad2(w_fused, self._K_pad, self._D_pad)
        self.b_eff_fused = _pad2(b_fused, 1, self._D_pad)

    @property
    def embedding_dim(self):
        return self._embed_dim

    # --- module API: preprocess / forward ---------------------------------
    def preprocess(self, x_u8):
        """x_u8: (H,W,3) or (B,H,W,3) uint8 -> (B, C, H, W) float32 (NCHW)."""
        x = jnp.asarray(x_u8)
        if x.ndim == 3:
            x = x[None]
        x = x.astype(jnp.float32) / 255.0
        x = (x - self.mean) / self.std
        return jnp.transpose(x, (0, 3, 1, 2))

    def forward(self, x_nchw):
        """x_nchw: (B, C, H, W) preprocessed f32 -> (B, D) features."""
        B = x_nchw.shape[0]
        pooled = _pool_patches_nchw(x_nchw, self.patch_size)     # (B, K)
        pooled = jnp.pad(pooled, ((0, 0), (0, self._K_pad - self._K)))
        out = pooled_linear_pallas(pooled, self.w_eff_nchw, self.b_eff_nchw)
        return out[:B, :self._D]

    # --- end-to-end fused path (uint8 in, preprocessing folded into weights)
    def get_features(self, x_u8):
        assert x_u8.dtype == np.uint8, "Expected input images' dtype to be np.uint8!"
        assert x_u8.shape[-1] == 3, "Expected final dimension to be channels (RGB) = 3!"
        assert x_u8.ndim in (3, 4), "Expected 3-dim (H,W,C) or 4-dim (B,H,W,C) input!"
        x = jnp.asarray(x_u8)
        if x.ndim == 3:
            x = x[None]
        B = x.shape[0]
        pooled = _pool_patches_nhwc(x, self.patch_size)          # (B, K) raw-pixel means
        pooled = jnp.pad(pooled, ((0, 0), (0, self._K_pad - self._K)))
        out = pooled_linear_pallas(pooled, self.w_eff_fused, self.b_eff_fused)
        return np.asarray(out[:B, :self._D])


# ---------------------------------------------------------------------------
if __name__ == "__main__":
    B, H, W = 2, 16, 16
    key = jax.random.PRNGKey(0)
    imgs = np.asarray(
        jax.random.randint(key, (B, H, W, 3), 0, 256, dtype=jnp.int32)
    ).astype(np.uint8)

    enc = VisualEncoderPallas(img_size=H, patch_size=4, embed_dim=32,
                              key=jax.random.PRNGKey(0))

    # End-to-end fused path (uint8 -> features), hot path in the Pallas kernel.
    feats_fused = enc.get_features(imgs)

    # Module-API path: preprocess -> forward.
    feats_fwd = jax.block_until_ready(enc.forward(enc.preprocess(imgs)))

    # Pure-JAX reference of the original (unfused) math:
    #   normalize -> NCHW patchify -> patch-embed -> mean-pool -> project.
    x = enc.preprocess(imgs)                                    # (B, C, H, W)
    Bc, C, Hh, Ww = x.shape
    P = enc.patch_size
    p = x.reshape(Bc, C, Hh // P, P, Ww // P, P)
    p = jnp.transpose(p, (0, 2, 4, 1, 3, 5)).reshape(Bc, -1, C * P * P)
    ref = jnp.mean(p @ enc.w_patch + enc.b_patch, axis=1) @ enc.w_proj + enc.b_proj

    np.testing.assert_allclose(np.asarray(feats_fwd), np.asarray(ref),
                               rtol=1e-4, atol=1e-4)
    np.testing.assert_allclose(feats_fused, np.asarray(ref),
                               rtol=1e-4, atol=1e-4)
    assert feats_fused.shape == (B, enc.embedding_dim)
    print("KERNEL_OK")
</pallas_src>

<mosaic_0001>
module attributes {stable_mosaic.version = 11 : i64} {
  func.func @_pooled_linear_kernel(%arg0: i32, %arg1: memref<8x128xf32, #tpu.memory_space<vmem>>, %arg2: memref<128x128xf32, #tpu.memory_space<vmem>>, %arg3: memref<1x128xf32, #tpu.memory_space<vmem>>, %arg4: memref<8x128xf32, #tpu.memory_space<vmem>>) attributes {dimension_semantics = [#tpu.dimension_semantics<parallel>], iteration_bounds = array<i64: 1>, scalar_prefetch = 0 : i64, scratch_operands = 0 : i64, tpu.core_type = #tpu.core_type<tc>, window_params = [{transform_indices = @transform_0, window_bounds = array<i64: 8, 128>}, {pipeline_mode = #tpu.pipeline_mode<synchronous>, transform_indices = @transform_1, window_bounds = array<i64: 128, 128>}, {pipeline_mode = #tpu.pipeline_mode<synchronous>, transform_indices = @transform_2, window_bounds = array<i64: 1, 128>}, {transform_indices = @transform_3, window_bounds = array<i64: 8, 128>}]} {
    %c0 = arith.constant 0 : index
    %c0_0 = arith.constant 0 : index
    %0 = vector.load %arg1[%c0, %c0_0] : memref<8x128xf32, #tpu.memory_space<vmem>>, vector<8x128xf32>
    %c0_1 = arith.constant 0 : index
    %c0_2 = arith.constant 0 : index
    %1 = vector.load %arg2[%c0_1, %c0_2] : memref<128x128xf32, #tpu.memory_space<vmem>>, vector<128x128xf32>
    %cst = arith.constant dense<0.000000e+00> : vector<8x128xf32>
    %2 = tpu.matmul %0, %1, %cst {dimension_numbers = #tpu.dot_dimension_numbers<[1], [0], [0], [1], [0, 0, 1, 1], [], []>} : vector<8x128xf32>, vector<128x128xf32>, vector<8x128xf32> -> vector<8x128xf32>
    %c0_3 = arith.constant 0 : index
    %c0_4 = arith.constant 0 : index
    %3 = vector.load %arg3[%c0_3, %c0_4] : memref<1x128xf32, #tpu.memory_space<vmem>>, vector<1x128xf32>
    %4 = vector.broadcast %3 : vector<1x128xf32> to vector<8x128xf32>
    %5 = arith.addf %2, %4 : vector<8x128xf32>
    %c0_5 = arith.constant 0 : index
    %c0_6 = arith.constant 0 : index
    %6 = vector.load %arg4[%c0_5, %c0_6] : memref<8x128xf32, #tpu.memory_space<vmem>>, vector<8x128xf32>
    tpu.vector_store %arg4[%c0_5, %c0_6], %5 {strides = array<i32>} : memref<8x128xf32, #tpu.memory_space<vmem>>, vector<8x128xf32>,
    return
  }
  func.func @transform_0(%arg0: i32) -> (i32, i32) {
    %c0_i32 = arith.constant 0 : i32
    %c0_i32_0 = arith.constant 0 : i32
    return %arg0, %c0_i32 : i32, i32
  }
  func.func @transform_1(%arg0: i32) -> (i32, i32) {
    %c0_i32 = arith.constant 0 : i32
    %c0_i32_0 = arith.constant 0 : i32
    %c0_i32_1 = arith.constant 0 : i32
    return %c0_i32, %c0_i32_0 : i32, i32
  }
  func.func @transform_2(%arg0: i32) -> (i32, i32) {
    %c0_i32 = arith.constant 0 : i32
    %c0_i32_0 = arith.constant 0 : i32
    %c0_i32_1 = arith.constant 0 : i32
    return %c0_i32, %c0_i32_0 : i32, i32
  }
  func.func @transform_3(%arg0: i32) -> (i32, i32) {
    %c0_i32 = arith.constant 0 : i32
    %c0_i32_0 = arith.constant 0 : i32
    return %arg0, %c0_i32 : i32, i32
  }
}

</mosaic_0001>

<llo_original>
// kernel: tpu_custom_call.1
$region0: #{tpu_custom_call.1}
  #allocation0 [shape = 'u32[]', space=smem, size = 0x4, offset = 0x4, fixed_abs, tag = 'smem constant byte address 0x4 - core index']
  #allocation1 [shape = 'u32[144,128]{1,0:T(1,128)}', space=vmem, size = 0x12000, scoped, tag = 'internal scratch']
  %s0 = inlined_call_operand.hbm [shape: f32[8,128], index: 0, kind: input, shape index: {}]
  %s1 = inlined_call_operand.hbm [shape: f32[128,128], index: 1, kind: input, shape index: {}]
  %s2 = inlined_call_operand.vmem [shape: f32[1,128], index: 2, kind: input, shape index: {}]
  %s3 = inlined_call_operand.hbm [shape: f32[8,128], index: 3, kind: output, shape index: {}]
  %s4 = sld [smem:[#allocation0]]
  $region30: #{tpu_custom_call.1} parent=0
    _
  %s6 = ssub.s32 1, %s4
  %s7 = scalar_select 0, %s6, %s4
  $region1: #{tpu_custom_call.1} parent=0
    #allocation2 [shape = 'u8[4096]{0}', space=vmem, size = 0x1000, scoped, tag = 'input window, operand 0, single buffered']
    #allocation3 [shape = 's32[1]{0}', space=sflag, size = 0x4, scoped, tag = 'scoped memory for tpu_custom_call.1']
    #allocation4 [shape = 's32[1]{0}', space=sflag, size = 0x4, scoped, tag = 'scoped memory for tpu_custom_call.1']
    #allocation5 [shape = 'u8[65536]{0}', space=vmem, size = 0x10000, scoped, tag = 'input window, operand 1, single buffered']
    #allocation6 [shape = 's32[1]{0}', space=sflag, size = 0x4, scoped, tag = 'scoped memory for tpu_custom_call.1']
    #allocation7 [shape = 'u8[4096]{0}', space=vmem, size = 0x1000, scoped, tag = 'output window, operand 0, single buffered']
    %8 = vsyncpa [#allocation3], 0
    %9 = vsyncpa [#allocation6], 0
    %10 = vsyncpa [#allocation4], 0
    // Predicated region
    $region2: #{tpu_custom_call.1} parent=1 // pred_check
      _
    $region3: #{tpu_custom_call.1} parent=1 // pred_check_branch
      %12 = sbr.rel (0) target = $region5
    $region4: #{tpu_custom_call.1} parent=1 // pred_region
      %s14 = ssub.s32 128, 128
      %15 = vsyncadd [#allocation3], %s14
      %s17 = sshll.u32 [#allocation2], 4
      %s18 = int_to_ptr.vmem [resolvable:$true] %s17
      %20 = dma.hbm_to_vmem [thread:$0]  %s0, 128, %s18, [#allocation3]
    $region5: #{tpu_custom_call.1} parent=1 // pred_fallthru
      _
    // Predicated region
    $region6: #{tpu_custom_call.1} parent=1 // pred_check
      _
    $region7: #{tpu_custom_call.1} parent=1 // pred_check_branch
      %22 = sbr.rel (0) target = $region9
    $region8: #{tpu_custom_call.1} parent=1 // pred_region
      %s24 = ssub.s32 2048, 2048
      %25 = vsyncadd [#allocation6], %s24
      %s26 = sshll.u32 [#allocation5], 4
      %s27 = int_to_ptr.vmem [resolvable:$true] %s26
      %32 = dma.hbm_to_vmem [thread:$0]  %s1, 2048, %s27, [#allocation6], 128, 128, 8
    $region9: #{tpu_custom_call.1} parent=1 // pred_fallthru
      _
    // Predicated region
    $region10: #{tpu_custom_call.1} parent=1 // pred_check
      _
    $region11: #{tpu_custom_call.1} parent=1 // pred_check_branch
      %34 = sbr.rel (0) target = $region13
    $region12: #{tpu_custom_call.1} parent=1 // pred_region
      _
    $region13: #{tpu_custom_call.1} parent=1 // pred_fallthru
      _
    // Predicated region
    $region14: #{tpu_custom_call.1} parent=1 // pred_check
      _
    $region15: #{tpu_custom_call.1} parent=1 // pred_check_branch
      %36 = sbr.rel (0) target = $region17
    $region16: #{tpu_custom_call.1} parent=1 // pred_region
      %37 = dma.done [#allocation3], 128
    $region17: #{tpu_custom_call.1} parent=1 // pred_fallthru
      _
    // Predicated region
    $region18: #{tpu_custom_call.1} parent=1 // pred_check
      _
    $region19: #{tpu_custom_call.1} parent=1 // pred_check_branch
      %39 = sbr.rel (0) target = $region21
    $region20: #{tpu_custom_call.1} parent=1 // pred_region
      %40 = dma.done [#allocation6], 2048
    $region21: #{tpu_custom_call.1} parent=1 // pred_fallthru
      _
    %v41 = vld [vmem:[#allocation2] sm:$0xff]
    %v42 = vld [vmem:[#allocation5] sm:$0xff]
    %v43 = vld [vmem:[#allocation5 + $0x8] sm:$0xff]
    %v44 = vld [vmem:[#allocation5 + $0x10] sm:$0xff]
    %v45 = vld [vmem:[#allocation5 + $0x18] sm:$0xff]
    %v46 = vld [vmem:[#allocation5 + $0x20] sm:$0xff]
    %v47 = vld [vmem:[#allocation5 + $0x28] sm:$0xff]
    %v48 = vld [vmem:[#allocation5 + $0x30] sm:$0xff]
    %v49 = vld [vmem:[#allocation5 + $0x38] sm:$0xff]
    %v50 = vld [vmem:[#allocation5 + $0x40] sm:$0xff]
    %v51 = vld [vmem:[#allocation5 + $0x48] sm:$0xff]
    %v52 = vld [vmem:[#allocation5 + $0x50] sm:$0xff]
    %v53 = vld [vmem:[#allocation5 + $0x58] sm:$0xff]
    %v54 = vld [vmem:[#allocation5 + $0x60] sm:$0xff]
    %v55 = vld [vmem:[#allocation5 + $0x68] sm:$0xff]
    %v56 = vld [vmem:[#allocation5 + $0x70] sm:$0xff]
    %v57 = vld [vmem:[#allocation5 + $0x78] sm:$0xff]
    %v58 = vld [vmem:[%s2] sm:$0x1]
    %v60 = vlaneseq
    %v61 = vshrl.u32 %v60, 7
    %v62 = vsub.s32 0, %v61
    %v63 = vrot.slane %v58, %v62
    %65 = vmatprep.subr.mxu0 0.0
    %66 = vmatpush1.msra.mxu0 %v42
    %67 = vmatprep.subr.mxu0 0.0
    %68 = vmatpush1.msra.mxu0 %v43
    %69 = vmatprep.subr.mxu0 0.0
    %70 = vmatpush1.msra.mxu0 %v44
    %71 = vmatprep.subr.mxu0 0.0
    %72 = vmatpush1.msra.mxu0 %v45
    %73 = vmatprep.subr.mxu0 0.0
    %74 = vmatpush1.msra.mxu0 %v46
    %75 = vmatprep.subr.mxu0 0.0
    %76 = vmatpush1.msra.mxu0 %v47
    %77 = vmatprep.subr.mxu0 0.0
    %78 = vmatpush1.msra.mxu0 %v48
    %79 = vmatprep.subr.mxu0 0.0
    %80 = vmatpush1.msra.mxu0 %v49
    %81 = vmatprep.subr.mxu0 0.0
    %82 = vmatpush1.msra.mxu0 %v50
    %83 = vmatprep.subr.mxu0 0.0
    %84 = vmatpush1.msra.mxu0 %v51
    %85 = vmatprep.subr.mxu0 0.0
    %86 = vmatpush1.msra.mxu0 %v52
    %87 = vmatprep.subr.mxu0 0.0
    %88 = vmatpush1.msra.mxu0 %v53
    %89 = vmatprep.subr.mxu0 0.0
    %90 = vmatpush1.msra.mxu0 %v54
    %91 = vmatprep.subr.mxu0 0.0
    %92 = vmatpush1.msra.mxu0 %v55
    %93 = vmatprep.subr.mxu0 0.0
    %94 = vmatpush1.msra.mxu0 %v56
    %95 = vmatprep.subr.mxu0 0.0
    %96 = vmatpush1.msra.mxu0 %v57
    %97 = vmatprep.subr.mxu0 0.0
    %98 = vmatpush1.msra.mxu0 0.0
    %99 = vmatprep.subr.mxu0 0.0
    %100 = vmatpush1.msra.mxu0 0.0
    %101 = vmatprep.subr.mxu0 0.0
    %102 = vmatpush1.msra.mxu0 0.0
    %103 = vmatprep.subr.mxu0 0.0
    %104 = vmatpush1.msra.mxu0 0.0
    %105 = vmatprep.subr.mxu0 0.0
    %106 = vmatpush1.msra.mxu0 0.0
    %107 = vmatprep.subr.mxu0 0.0
    %108 = vmatpush1.msra.mxu0 0.0
    %109 = vmatprep.subr.mxu0 0.0
    %110 = vmatpush1.msra.mxu0 0.0
    %111 = vmatprep.subr.mxu0 0.0
    %112 = vmatpush1.msra.mxu0 0.0
    %113 = vmatprep.subr.mxu0 0.0
    %114 = vmatpush1.msra.mxu0 0.0
    %115 = vmatprep.subr.mxu0 0.0
    %116 = vmatpush1.msra.mxu0 0.0
    %117 = vmatprep.subr.mxu0 0.0
    %118 = vmatpush1.msra.mxu0 0.0
    %119 = vmatprep.subr.mxu0 0.0
    %120 = vmatpush1.msra.mxu0 0.0
    %121 = vmatprep.subr.mxu0 0.0
    %122 = vmatpush1.msra.mxu0 0.0
    %123 = vmatprep.subr.mxu0 0.0
    %124 = vmatpush1.msra.mxu0 0.0
    %125 = vmatprep.subr.mxu0 0.0
    %126 = vmatpush1.msra.mxu0 0.0
    %127 = vmatprep.subr.mxu0 0.0
    %128 = vmatpush1.msra.mxu0 0.0
    %129 = vmatprep.mubr.f32.mxu0 0.0
    %130 = vmatmul.mubr.f32.gmra.mrb[0].mxu0 %v41
    %v131 = vpop.f32.mrb[0].mxu0
    %v132 = vadd.f32 %v63, %v131
    %v133 = vpop.f32.mrb[0].mxu0
    %134 = vdwg.mxu0
    %135 = vst [vmem:[#allocation7] sm:$0xff] %v132
    // Predicated region
    $region22: #{tpu_custom_call.1} parent=1 // pred_check
      _
    $region23: #{tpu_custom_call.1} parent=1 // pred_check_branch
      %137 = sbr.rel (0) target = $region25
    $region24: #{tpu_custom_call.1} parent=1 // pred_region
      %s139 = ssub.s32 128, 128
      %140 = vsyncadd [#allocation4], %s139
      %s142 = sshll.u32 [#allocation7], 4
      %s143 = int_to_ptr.vmem [resolvable:$true] %s142
      %145 = dma.vmem_to_hbm [thread:$0]  %s143, 128, %s3, [#allocation4]
    $region25: #{tpu_custom_call.1} parent=1 // pred_fallthru
      _
    // Predicated region
    $region26: #{tpu_custom_call.1} parent=1 // pred_check
      _
    $region27: #{tpu_custom_call.1} parent=1 // pred_check_branch
      %147 = sbr.rel (0) target = $region29
    $region28: #{tpu_custom_call.1} parent=1 // pred_region
      %148 = dma.done [#allocation4], 128
    $region29: #{tpu_custom_call.1} parent=1 // pred_fallthru
      _
    %149 = vsyncpa [#allocation3], 1
    %150 = vsyncpa [#allocation6], 1
    %151 = vsyncpa [#allocation4], 1

</llo_original>
